<compile_context>
chip_gen: v7x
topology: tpu7x:2x2x1
jax: 0.10.0
libtpu: 0.0.40
codegen_flags: <defaults>
</compile_context>

<pallas_src>
import math

import jax
import jax.numpy as jnp
from jax.experimental import pallas as pl
from jax.experimental.pallas import tpu as pltpu

LOG_SQRT_2PI = 0.5 * math.log(2.0 * math.pi)
HIDDEN = 16      # fixed by the module: fc1/fc2 are Linear(., 16)
TB_CAP = 8192    # max batch tile (lane axis); ~7 MiB/step -> fits v5e's 16 MiB default VMEM


def _round_up(x, m):
    return (x + m - 1) // m * m


def _cdiv(a, b):
    return (a + b - 1) // b


def pack_params(params):
    """Pack the 8 weight/bias tensors into one weight slab + one bias column.

    Call ONCE per parameter update (hoisted out of the forward pass).

    params: dict with w1[state_dim,16], b1[16], w2[16,16], b2[16],
            wmu[16,action_dim], bmu[action_dim],
            wsig[16,action_dim], bsig[action_dim]   (weights stored [in, out]).
    """
    f32 = jnp.float32
    S = params["w1"].shape[0]
    A = params["wmu"].shape[1]
    A_pad = _round_up(A, 8)
    CW = max(S, HIDDEN)                    # slab width: holds w1 (S cols) and w2 (16 cols)
    n_prow = 2 * HIDDEN + 2 * A_pad

    w = jnp.zeros((n_prow, CW), f32)
    w = w.at[0:HIDDEN, 0:S].set(params["w1"].T.astype(f32))
    w = w.at[HIDDEN:2 * HIDDEN, 0:HIDDEN].set(params["w2"].T.astype(f32))
    w = w.at[2 * HIDDEN:2 * HIDDEN + A, 0:HIDDEN].set(params["wmu"].T.astype(f32))
    w = w.at[2 * HIDDEN + A_pad:2 * HIDDEN + A_pad + A, 0:HIDDEN].set(
        params["wsig"].T.astype(f32))

    b = jnp.zeros((n_prow, 1), f32)
    b = b.at[0:HIDDEN, 0].set(params["b1"].astype(f32))
    b = b.at[HIDDEN:2 * HIDDEN, 0].set(params["b2"].astype(f32))
    b = b.at[2 * HIDDEN:2 * HIDDEN + A, 0].set(params["bmu"].astype(f32))
    b = b.at[2 * HIDDEN + A_pad:2 * HIDDEN + A_pad + A, 0].set(
        params["bsig"].astype(f32))
    return {"w": w, "b": b}


def _make_kernel(S, A, A_pad, rows_out, use_given_action):
    """Fused actor kernel. Transposed layout: features on sublanes, batch on lanes.

    aux_ref is either standard-normal noise (sample path, reparameterized
    mu + sigma*eps) or the externally supplied action.
    """

    def kernel(x_ref, aux_ref, w_ref, b_ref, ar_ref, out_ref):
        x = x_ref[...]                                       # [S, TB]

        # fc1 + relu : [16, S] @ [S, TB]
        w1 = w_ref[0:HIDDEN, 0:S]
        b1 = b_ref[0:HIDDEN, :]
        h1 = jnp.maximum(
            jnp.dot(w1, x, preferred_element_type=jnp.float32) + b1, 0.0)

        # fc2 + relu : [16, 16] @ [16, TB]
        w2 = w_ref[HIDDEN:2 * HIDDEN, 0:HIDDEN]
        b2 = b_ref[HIDDEN:2 * HIDDEN, :]
        h2 = jnp.maximum(
            jnp.dot(w2, h1, preferred_element_type=jnp.float32) + b2, 0.0)

        # fused mu || sigma head : [2*A_pad, 16] @ [16, TB]
        wh = w_ref[2 * HIDDEN:2 * HIDDEN + 2 * A_pad, 0:HIDDEN]
        bh = b_ref[2 * HIDDEN:2 * HIDDEN + 2 * A_pad, :]
        heads = jnp.dot(wh, h2, preferred_element_type=jnp.float32) + bh

        # mu head: 2 * tanh(.)   (only the A real rows)
        mu = 2.0 * jnp.tanh(heads[0:A, :])

        # sigma head: softplus(.)  (matches F.softplus threshold=20)
        z = heads[A_pad:A_pad + A, :]
        sigma = jnp.where(z > 20.0, z, jnp.log1p(jnp.exp(jnp.minimum(z, 20.0))))

        if use_given_action:
            action = aux_ref[...]                            # [A, TB]
        else:
            # dist.sample() == mu + sigma * eps,  eps ~ N(0, 1)
            action = mu + sigma * aux_ref[...]

        log_sigma = jnp.log(sigma)
        entropy = 0.5 + LOG_SQRT_2PI + log_sigma

        # clamp, then log_prob on the clamped action (matches module order)
        ar = ar_ref[0, 0]
        action = jnp.clip(action, -ar, ar)

        inv_sigma = pl.reciprocal(sigma, approx=False)       # exact; keeps 1e-5 tol
        diff = (action - mu) * inv_sigma
        log_prob = -0.5 * diff * diff - log_sigma - LOG_SQRT_2PI

        # packed, lane-dense output slab rows: [action ; log_prob ; entropy ; pad]
        out_ref[0:A, :] = action
        out_ref[A:2 * A, :] = log_prob
        out_ref[2 * A:3 * A, :] = entropy
        if 3 * A < rows_out:
            out_ref[3 * A:rows_out, :] = jnp.zeros(
                (rows_out - 3 * A, out_ref.shape[1]), jnp.float32)

    return kernel


@jax.jit
def _forward(state, packed, action_range, noise, action):
    f32 = jnp.float32
    B, S = state.shape
    w, b = packed["w"], packed["b"]

    use_given_action = action is not None
    aux = action if use_given_action else noise
    assert aux is not None, "need noise when action is None"
    A = aux.shape[1]
    A_pad = (w.shape[0] - 2 * HIDDEN) // 2
    assert A_pad == _round_up(A, 8), "packed params do not match action_dim"
    assert w.shape[1] >= max(S, HIDDEN), "packed params do not match state_dim"
    rows_out = _round_up(3 * A, 8)
    n_prow, CW = w.shape

    # ---- batch tile on the lane axis ----
    # Biggest tile that fits comfortably in VMEM; >=2 grid steps for larger
    # batches so the "parallel" batch axis can shard across v7x's two
    # TensorCores (one extra ~0.35us step is negligible on 1-TC chips).
    min_steps = 2 if B >= 512 else 1
    nb = max(_cdiv(B, TB_CAP), min_steps)
    TB = _round_up(_cdiv(B, nb), 128)
    B_pad = nb * TB

    # transpose + pad inputs so batch is on the lane axis.
    # Under jit this fuses into a single copy per input.
    x_t = jnp.zeros((S, B_pad), f32).at[:, 0:B].set(state.T.astype(f32))
    aux_t = jnp.zeros((A, B_pad), f32).at[:, 0:B].set(aux.T.astype(f32))
    ar = jnp.asarray(action_range, f32).reshape(1, 1)

    kernel = _make_kernel(S, A, A_pad, rows_out, use_given_action)

    slab = pl.pallas_call(
        kernel,
        out_shape=jax.ShapeDtypeStruct((rows_out, B_pad), f32),
        grid=(nb,),
        in_specs=[
            pl.BlockSpec((S, TB), lambda i: (0, i)),        # state tile
            pl.BlockSpec((A, TB), lambda i: (0, i)),        # noise / action tile
            pl.BlockSpec((n_prow, CW), lambda i: (0, 0)),   # packed weights (VMEM-resident)
            pl.BlockSpec((n_prow, 1), lambda i: (0, 0)),    # packed biases  (VMEM-resident)
            pl.BlockSpec((1, 1), lambda i: (0, 0)),         # action_range (runtime scalar)
        ],
        out_specs=pl.BlockSpec((rows_out, TB), lambda i: (0, i)),
        compiler_params=pltpu.CompilerParams(
            dimension_semantics=("parallel",)),
    )(x_t, aux_t, w, b, ar)

    # ONE transpose back to [B, 3A] (fused under jit), then split columns.
    res = slab[0:3 * A, 0:B].T
    return res[:, 0:A], res[:, A:2 * A], res[:, 2 * A:3 * A]


def a2c_actor_cont(state, packed, action_range, noise=None, action=None):
    """Pallas equivalent of A2CActorCont.forward.

    state:  [B, state_dim] float
    packed: output of pack_params(params)  (call once per parameter update)
    noise:  [B, action_dim] standard-normal draws (used iff action is None)
    action: optional [B, action_dim] externally supplied action
    Returns (action, action_log_prob, action_entropy), each [B, action_dim].
    """
    # TODO(synk): torch Normal.sample() RNG is taken as an explicit `noise`
    # input (reparameterized mu + sigma*eps) rather than an in-kernel PRNG.
    return _forward(state, packed, action_range, noise, action)


def _reference(state, params, action_range, noise=None, action=None):
    """Pure-JAX reference of the same forward pass."""
    h1 = jnp.maximum(state @ params["w1"] + params["b1"], 0.0)
    h2 = jnp.maximum(h1 @ params["w2"] + params["b2"], 0.0)
    mu = 2.0 * jnp.tanh(h2 @ params["wmu"] + params["bmu"])
    z = h2 @ params["wsig"] + params["bsig"]
    sigma = jnp.where(z > 20.0, z, jnp.log1p(jnp.exp(jnp.minimum(z, 20.0))))
    act = action if action is not None else mu + sigma * noise
    ent = 0.5 + LOG_SQRT_2PI + jnp.log(sigma)
    act = jnp.clip(act, -action_range, action_range)
    logp = -((act - mu) ** 2) / (2.0 * sigma ** 2) - jnp.log(sigma) - LOG_SQRT_2PI
    return act, logp, ent


if __name__ == "__main__":
    key = jax.random.PRNGKey(0)
    B, state_dim, hidden, action_dim = 8, 8, 16, 4
    action_range = 2.0

    ks = jax.random.split(key, 10)
    params = {
        "w1":   0.1 * jax.random.normal(ks[0], (state_dim, hidden), jnp.float32),
        "b1":   0.1 * jax.random.normal(ks[1], (hidden,), jnp.float32),
        "w2":   0.1 * jax.random.normal(ks[2], (hidden, hidden), jnp.float32),
        "b2":   0.1 * jax.random.normal(ks[3], (hidden,), jnp.float32),
        "wmu":  0.1 * jax.random.normal(ks[4], (hidden, action_dim), jnp.float32),
        "bmu":  0.1 * jax.random.normal(ks[5], (action_dim,), jnp.float32),
        "wsig": 0.1 * jax.random.normal(ks[6], (hidden, action_dim), jnp.float32),
        "bsig": 0.1 * jax.random.normal(ks[7], (action_dim,), jnp.float32),
    }
    state = jax.random.normal(ks[8], (B, state_dim), jnp.float32)
    noise = jax.random.normal(ks[9], (B, action_dim), jnp.float32)

    packed = pack_params(params)   # hoisted: once per parameter update

    # action=None path: sample via reparameterization with the provided noise
    act, logp, ent = a2c_actor_cont(state, packed, action_range, noise=noise)
    jax.block_until_ready((act, logp, ent))

    act_r, logp_r, ent_r = _reference(state, params, action_range, noise=noise)
    assert jnp.allclose(act, act_r, atol=1e-5, rtol=1e-5)
    assert jnp.allclose(logp, logp_r, atol=1e-5, rtol=1e-5)
    assert jnp.allclose(ent, ent_r, atol=1e-5, rtol=1e-5)

    # action-provided path
    act2, logp2, ent2 = a2c_actor_cont(state, packed, action_range, action=act)
    jax.block_until_ready((act2, logp2, ent2))

    act2_r, logp2_r, ent2_r = _reference(state, params, action_range, action=act)
    assert jnp.allclose(act2, act2_r, atol=1e-5, rtol=1e-5)
    assert jnp.allclose(logp2, logp2_r, atol=1e-5, rtol=1e-5)
    assert jnp.allclose(ent2, ent2_r, atol=1e-5, rtol=1e-5)

    print("KERNEL_OK")
</pallas_src>

<mosaic_0001>
module attributes {stable_mosaic.version = 11 : i64} {
  func.func @kernel(%arg0: i32, %arg1: memref<8x128xf32, #tpu.memory_space<vmem>>, %arg2: memref<4x128xf32, #tpu.memory_space<vmem>>, %arg3: memref<48x16xf32, #tpu.memory_space<vmem>>, %arg4: memref<48x1xf32, #tpu.memory_space<vmem>>, %arg5: memref<1x1xf32, #tpu.memory_space<vmem>>, %arg6: memref<16x128xf32, #tpu.memory_space<vmem>>) attributes {dimension_semantics = [#tpu.dimension_semantics<parallel>], iteration_bounds = array<i64: 1>, scalar_prefetch = 0 : i64, scratch_operands = 0 : i64, tpu.core_type = #tpu.core_type<tc>, window_params = [{transform_indices = @transform_0, window_bounds = array<i64: 8, 128>}, {transform_indices = @transform_1, window_bounds = array<i64: 4, 128>}, {pipeline_mode = #tpu.pipeline_mode<synchronous>, transform_indices = @transform_2, window_bounds = array<i64: 48, 16>}, {pipeline_mode = #tpu.pipeline_mode<synchronous>, transform_indices = @transform_3, window_bounds = array<i64: 48, 1>}, {pipeline_mode = #tpu.pipeline_mode<synchronous>, transform_indices = @transform_4, window_bounds = array<i64: 1, 1>}, {transform_indices = @transform_5, window_bounds = array<i64: 16, 128>}]} {
    %c0 = arith.constant 0 : index
    %c0_0 = arith.constant 0 : index
    %0 = vector.load %arg1[%c0, %c0_0] : memref<8x128xf32, #tpu.memory_space<vmem>>, vector<8x128xf32>
    %c0_1 = arith.constant 0 : index
    %c0_2 = arith.constant 0 : index
    %1 = vector.load %arg3[%c0_1, %c0_2] : memref<48x16xf32, #tpu.memory_space<vmem>>, vector<16x8xf32>
    %c0_3 = arith.constant 0 : index
    %c0_4 = arith.constant 0 : index
    %2 = vector.load %arg4[%c0_3, %c0_4] : memref<48x1xf32, #tpu.memory_space<vmem>>, vector<16x1xf32>
    %cst = arith.constant dense<0.000000e+00> : vector<16x128xf32>
    %3 = tpu.matmul %1, %0, %cst {dimension_numbers = #tpu.dot_dimension_numbers<[1], [0], [0], [1], [0, 0, 1, 1], [], []>} : vector<16x8xf32>, vector<8x128xf32>, vector<16x128xf32> -> vector<16x128xf32>
    %4 = vector.broadcast %2 : vector<16x1xf32> to vector<16x128xf32>
    %5 = arith.addf %3, %4 : vector<16x128xf32>
    %cst_5 = arith.constant 0.000000e+00 : f32
    %6 = vector.broadcast %cst_5 : f32 to vector<16x128xf32>
    %7 = arith.maximumf %5, %6 : vector<16x128xf32>
    %c16 = arith.constant 16 : index
    %c0_6 = arith.constant 0 : index
    %8 = vector.load %arg3[%c16, %c0_6] : memref<48x16xf32, #tpu.memory_space<vmem>>, vector<16x16xf32>
    %c16_7 = arith.constant 16 : index
    %c0_8 = arith.constant 0 : index
    %9 = vector.load %arg4[%c16_7, %c0_8] : memref<48x1xf32, #tpu.memory_space<vmem>>, vector<16x1xf32>
    %cst_9 = arith.constant dense<0.000000e+00> : vector<16x128xf32>
    %10 = tpu.matmul %8, %7, %cst_9 {dimension_numbers = #tpu.dot_dimension_numbers<[1], [0], [0], [1], [0, 0, 1, 1], [], []>} : vector<16x16xf32>, vector<16x128xf32>, vector<16x128xf32> -> vector<16x128xf32>
    %11 = vector.broadcast %9 : vector<16x1xf32> to vector<16x128xf32>
    %12 = arith.addf %10, %11 : vector<16x128xf32>
    %cst_10 = arith.constant 0.000000e+00 : f32
    %13 = vector.broadcast %cst_10 : f32 to vector<16x128xf32>
    %14 = arith.maximumf %12, %13 : vector<16x128xf32>
    %c32 = arith.constant 32 : index
    %c0_11 = arith.constant 0 : index
    %15 = vector.load %arg3[%c32, %c0_11] : memref<48x16xf32, #tpu.memory_space<vmem>>, vector<16x16xf32>
    %c32_12 = arith.constant 32 : index
    %c0_13 = arith.constant 0 : index
    %16 = vector.load %arg4[%c32_12, %c0_13] : memref<48x1xf32, #tpu.memory_space<vmem>>, vector<16x1xf32>
    %cst_14 = arith.constant dense<0.000000e+00> : vector<16x128xf32>
    %17 = tpu.matmul %15, %14, %cst_14 {dimension_numbers = #tpu.dot_dimension_numbers<[1], [0], [0], [1], [0, 0, 1, 1], [], []>} : vector<16x16xf32>, vector<16x128xf32>, vector<16x128xf32> -> vector<16x128xf32>
    %18 = vector.broadcast %16 : vector<16x1xf32> to vector<16x128xf32>
    %19 = arith.addf %17, %18 : vector<16x128xf32>
    %20 = vector.extract_strided_slice %19 {offsets = [0, 0], sizes = [4, 128], strides = [1, 1]} : vector<16x128xf32> to vector<4x128xf32>
    %21 = math.tanh %20 : vector<4x128xf32>
    %cst_15 = arith.constant 2.000000e+00 : f32
    %22 = vector.broadcast %cst_15 : f32 to vector<4x128xf32>
    %23 = arith.mulf %22, %21 : vector<4x128xf32>
    %24 = vector.extract_strided_slice %19 {offsets = [8, 0], sizes = [4, 128], strides = [1, 1]} : vector<16x128xf32> to vector<4x128xf32>
    %cst_16 = arith.constant 2.000000e+01 : f32
    %25 = vector.broadcast %cst_16 : f32 to vector<4x128xf32>
    %26 = arith.cmpf ogt, %24, %25 : vector<4x128xf32>
    %cst_17 = arith.constant 2.000000e+01 : f32
    %27 = vector.broadcast %cst_17 : f32 to vector<4x128xf32>
    %28 = arith.minimumf %24, %27 : vector<4x128xf32>
    %29 = math.exp %28 : vector<4x128xf32>
    %30 = math.log1p %29 : vector<4x128xf32>
    %31 = arith.select %26, %24, %30 : vector<4x128xi1>, vector<4x128xf32>
    %c0_18 = arith.constant 0 : index
    %c0_19 = arith.constant 0 : index
    %32 = vector.load %arg2[%c0_18, %c0_19] : memref<4x128xf32, #tpu.memory_space<vmem>>, vector<4x128xf32>
    %33 = arith.mulf %31, %32 : vector<4x128xf32>
    %34 = arith.addf %23, %33 : vector<4x128xf32>
    %35 = math.log %31 : vector<4x128xf32>
    %cst_20 = arith.constant 1.41893852 : f32
    %36 = vector.broadcast %cst_20 : f32 to vector<4x128xf32>
    %37 = arith.addf %36, %35 : vector<4x128xf32>
    %c0_21 = arith.constant 0 : index
    %c0_22 = arith.constant 0 : index
    %38 = vector.load %arg5[%c0_21, %c0_22] : memref<1x1xf32, #tpu.memory_space<vmem>>, vector<1x1xf32>
    %39 = vector.extract %38[0, 0] : f32 from vector<1x1xf32>
    %cst_23 = arith.constant 0.000000e+00 : f32
    %40 = arith.subf %cst_23, %39 : f32
    %41 = vector.broadcast %40 : f32 to vector<4x128xf32>
    %42 = arith.maximumf %41, %34 : vector<4x128xf32>
    %43 = vector.broadcast %39 : f32 to vector<4x128xf32>
    %44 = arith.minimumf %43, %42 : vector<4x128xf32>
    %45 = tpu.reciprocal %31 : vector<4x128xf32> -> vector<4x128xf32>
    %46 = arith.subf %44, %23 : vector<4x128xf32>
    %47 = arith.mulf %46, %45 : vector<4x128xf32>
    %cst_24 = arith.constant -5.000000e-01 : f32
    %48 = vector.broadcast %cst_24 : f32 to vector<4x128xf32>
    %49 = arith.mulf %48, %47 : vector<4x128xf32>
    %50 = arith.mulf %49, %47 : vector<4x128xf32>
    %51 = arith.subf %50, %35 : vector<4x128xf32>
    %cst_25 = arith.constant 0.918938517 : f32
    %52 = vector.broadcast %cst_25 : f32 to vector<4x128xf32>
    %53 = arith.subf %51, %52 : vector<4x128xf32>
    %c0_26 = arith.constant 0 : index
    %c0_27 = arith.constant 0 : index
    %54 = vector.load %arg6[%c0_26, %c0_27] : memref<16x128xf32, #tpu.memory_space<vmem>>, vector<4x128xf32>
    tpu.vector_store %arg6[%c0_26, %c0_27], %44 {strides = array<i32>} : memref<16x128xf32, #tpu.memory_space<vmem>>, vector<4x128xf32>,
    %c4 = arith.constant 4 : index
    %c0_28 = arith.constant 0 : index
    %55 = vector.load %arg6[%c4, %c0_28] : memref<16x128xf32, #tpu.memory_space<vmem>>, vector<4x128xf32>
    tpu.vector_store %arg6[%c4, %c0_28], %53 {strides = array<i32>} : memref<16x128xf32, #tpu.memory_space<vmem>>, vector<4x128xf32>,
    %c8 = arith.constant 8 : index
    %c0_29 = arith.constant 0 : index
    %56 = vector.load %arg6[%c8, %c0_29] : memref<16x128xf32, #tpu.memory_space<vmem>>, vector<4x128xf32>
    tpu.vector_store %arg6[%c8, %c0_29], %37 {strides = array<i32>} : memref<16x128xf32, #tpu.memory_space<vmem>>, vector<4x128xf32>,
    %cst_30 = arith.constant 0.000000e+00 : f32
    %57 = vector.broadcast %cst_30 : f32 to vector<4x128xf32>
    %c12 = arith.constant 12 : index
    %c0_31 = arith.constant 0 : index
    %58 = vector.load %arg6[%c12, %c0_31] : memref<16x128xf32, #tpu.memory_space<vmem>>, vector<4x128xf32>
    tpu.vector_store %arg6[%c12, %c0_31], %57 {strides = array<i32>} : memref<16x128xf32, #tpu.memory_space<vmem>>, vector<4x128xf32>,
    return
  }
  func.func @transform_0(%arg0: i32) -> (i32, i32) {
    %c0_i32 = arith.constant 0 : i32
    %c0_i32_0 = arith.constant 0 : i32
    return %c0_i32, %arg0 : i32, i32
  }
  func.func @transform_1(%arg0: i32) -> (i32, i32) {
    %c0_i32 = arith.constant 0 : i32
    %c0_i32_0 = arith.constant 0 : i32
    return %c0_i32, %arg0 : i32, i32
  }
  func.func @transform_2(%arg0: i32) -> (i32, i32) {
    %c0_i32 = arith.constant 0 : i32
    %c0_i32_0 = arith.constant 0 : i32
    %c0_i32_1 = arith.constant 0 : i32
    return %c0_i32, %c0_i32_0 : i32, i32
  }
  func.func @transform_3(%arg0: i32) -> (i32, i32) {
    %c0_i32 = arith.constant 0 : i32
    %c0_i32_0 = arith.constant 0 : i32
    %c0_i32_1 = arith.constant 0 : i32
    return %c0_i32, %c0_i32_0 : i32, i32
  }
  func.func @transform_4(%arg0: i32) -> (i32, i32) {
    %c0_i32 = arith.constant 0 : i32
    %c0_i32_0 = arith.constant 0 : i32
    %c0_i32_1 = arith.constant 0 : i32
    return %c0_i32, %c0_i32_0 : i32, i32
  }
  func.func @transform_5(%arg0: i32) -> (i32, i32) {
    %c0_i32 = arith.constant 0 : i32
    %c0_i32_0 = arith.constant 0 : i32
    return %c0_i32, %arg0 : i32, i32
  }
}

</mosaic_0001>

<llo_original>
// kernel: _forward.1
$region0: #{_forward.1}
  #allocation0 [shape = 'u32[]', space=smem, size = 0x4, offset = 0x4, fixed_abs, tag = 'smem constant byte address 0x4 - core index']
  #allocation1 [shape = 'u32[144,128]{1,0:T(1,128)}', space=vmem, size = 0x12000, scoped, tag = 'internal scratch']
  #allocation2 [shape = 'f32[1,1]{1,0:T(1,128)S(1)}', space=vmem, size = 0x200, scoped, tag = 'scoped memory for _forward.1']
  %s0 = inlined_call_operand.vmem [shape: f32[8,128], index: 0, kind: input, shape index: {}]
  %s1 = inlined_call_operand.vmem [shape: f32[4,128], index: 1, kind: input, shape index: {}]
  %s2 = inlined_call_operand.vmem [shape: f32[48,16], index: 2, kind: input, shape index: {}]
  %s3 = inlined_call_operand.vmem [shape: f32[48,1], index: 3, kind: input, shape index: {}]
  %s4 = inlined_call_operand.<no memory space> [shape: f32[1,1], index: 4, kind: input, shape index: {}]
  %s5 = inlined_call_operand.vmem [shape: f32[16,128], index: 5, kind: output, shape index: {}]
  %s6 = sld [smem:[#allocation0]]
  $region30: #{_forward.1} parent=0
    _
  %s8 = ssub.s32 1, %s6
  %s9 = scalar_select 0, %s8, %s6
  %v10 = vstv %s4
  %11 = vst [vmem:[#allocation2] sm:$0x1] %v10
  // Predicated region
  $region2: #{_forward.1} parent=0 // pred_check
    _
  $region3: #{_forward.1} parent=0 // pred_check_branch
    %13 = sbr.rel (0) target = $region5
  $region4: #{_forward.1} parent=0 // pred_region
    _
  $region5: #{_forward.1} parent=0 // pred_fallthru
    _
  // Predicated region
  $region6: #{_forward.1} parent=0 // pred_check
    _
  $region7: #{_forward.1} parent=0 // pred_check_branch
    %15 = sbr.rel (0) target = $region9
  $region8: #{_forward.1} parent=0 // pred_region
    _
  $region9: #{_forward.1} parent=0 // pred_fallthru
    _
  // Predicated region
  $region10: #{_forward.1} parent=0 // pred_check
    _
  $region11: #{_forward.1} parent=0 // pred_check_branch
    %17 = sbr.rel (0) target = $region13
  $region12: #{_forward.1} parent=0 // pred_region
    _
  $region13: #{_forward.1} parent=0 // pred_fallthru
    _
  // Predicated region
  $region14: #{_forward.1} parent=0 // pred_check
    _
  $region15: #{_forward.1} parent=0 // pred_check_branch
    %19 = sbr.rel (0) target = $region17
  $region16: #{_forward.1} parent=0 // pred_region
    _
  $region17: #{_forward.1} parent=0 // pred_fallthru
    _
  // Predicated region
  $region18: #{_forward.1} parent=0 // pred_check
    _
  $region19: #{_forward.1} parent=0 // pred_check_branch
    %21 = sbr.rel (0) target = $region21
  $region20: #{_forward.1} parent=0 // pred_region
    _
  $region21: #{_forward.1} parent=0 // pred_fallthru
    _
  %v22 = vld [vmem:[%s0] sm:$0xff]
  %v23 = vld [vmem:[%s2] sm:$0xff]
  %v24 = vld [vmem:[%s2 + $0x8] sm:$0xff]
  %v25 = vld [vmem:[%s3] sm:$0xff]
  %v26 = vld [vmem:[%s3 + $0x8] sm:$0xff]
  %28 = vset.pattern.permute.xlu0 0
  %29 = vperm.xlu0 %28, %v25
  %v30 = vpop.permute.xlu0 %29
  %33 = vset.pattern.permute.xlu0 0
  %34 = vperm.xlu0 %33, %v26
  %v35 = vpop.permute.xlu0 %34
  %vm37 = vcmask 64512
  %v39 = vsel %vm37, %v23, 0
  %v42 = vsel %vm37, %v24, 0
  %44 = vmatprep.subr.mxu0 0.0
  %45 = vmatpush1.msra.mxu0 %v22
  %46 = vmatprep.subr.mxu0 0.0
  %47 = vmatpush1.msra.mxu0 0.0
  %48 = vmatprep.subr.mxu0 0.0
  %49 = vmatpush1.msra.mxu0 0.0
  %50 = vmatprep.subr.mxu0 0.0
  %51 = vmatpush1.msra.mxu0 0.0
  %52 = vmatprep.subr.mxu0 0.0
  %53 = vmatpush1.msra.mxu0 0.0
  %54 = vmatprep.subr.mxu0 0.0
  %55 = vmatpush1.msra.mxu0 0.0
  %56 = vmatprep.subr.mxu0 0.0
  %57 = vmatpush1.msra.mxu0 0.0
  %58 = vmatprep.subr.mxu0 0.0
  %59 = vmatpush1.msra.mxu0 0.0
  %60 = vmatprep.subr.mxu0 0.0
  %61 = vmatpush1.msra.mxu0 0.0
  %62 = vmatprep.subr.mxu0 0.0
  %63 = vmatpush1.msra.mxu0 0.0
  %64 = vmatprep.subr.mxu0 0.0
  %65 = vmatpush1.msra.mxu0 0.0
  %66 = vmatprep.subr.mxu0 0.0
  %67 = vmatpush1.msra.mxu0 0.0
  %68 = vmatprep.subr.mxu0 0.0
  %69 = vmatpush1.msra.mxu0 0.0
  %70 = vmatprep.subr.mxu0 0.0
  %71 = vmatpush1.msra.mxu0 0.0
  %72 = vmatprep.subr.mxu0 0.0
  %73 = vmatpush1.msra.mxu0 0.0
  %74 = vmatprep.subr.mxu0 0.0
  %75 = vmatpush1.msra.mxu0 0.0
  %76 = vmatprep.subr.mxu0 0.0
  %77 = vmatpush1.msra.mxu0 0.0
  %78 = vmatprep.subr.mxu0 0.0
  %79 = vmatpush1.msra.mxu0 0.0
  %80 = vmatprep.subr.mxu0 0.0
  %81 = vmatpush1.msra.mxu0 0.0
  %82 = vmatprep.subr.mxu0 0.0
  %83 = vmatpush1.msra.mxu0 0.0
  %84 = vmatprep.subr.mxu0 0.0
  %85 = vmatpush1.msra.mxu0 0.0
  %86 = vmatprep.subr.mxu0 0.0
  %87 = vmatpush1.msra.mxu0 0.0
  %88 = vmatprep.subr.mxu0 0.0
  %89 = vmatpush1.msra.mxu0 0.0
  %90 = vmatprep.subr.mxu0 0.0
  %91 = vmatpush1.msra.mxu0 0.0
  %92 = vmatprep.subr.mxu0 0.0
  %93 = vmatpush1.msra.mxu0 0.0
  %94 = vmatprep.subr.mxu0 0.0
  %95 = vmatpush1.msra.mxu0 0.0
  %96 = vmatprep.subr.mxu0 0.0
  %97 = vmatpush1.msra.mxu0 0.0
  %98 = vmatprep.subr.mxu0 0.0
  %99 = vmatpush1.msra.mxu0 0.0
  %100 = vmatprep.subr.mxu0 0.0
  %101 = vmatpush1.msra.mxu0 0.0
  %102 = vmatprep.subr.mxu0 0.0
  %103 = vmatpush1.msra.mxu0 0.0
  %104 = vmatprep.subr.mxu0 0.0
  %105 = vmatpush1.msra.mxu0 0.0
  %106 = vmatprep.subr.mxu0 0.0
  %107 = vmatpush1.msra.mxu0 0.0
  %108 = vmatprep.mubr.f32.mxu0 0.0
  %109 = vmatmul.mubr.f32.gmra.mrb[0].mxu0 %v39
  %v110 = vpop.f32.mrb[0].mxu0
  %v111 = vadd.f32 %v30, %v110
  %v112 = vpop.f32.mrb[0].mxu0
  %113 = vmatprep.mubr.f32.mxu0 0.0
  %114 = vmatmul.mubr.f32.gmra.mrb[0].mxu0 %v42
  %v115 = vpop.f32.mrb[0].mxu0
  %v116 = vadd.f32 %v35, %v115
  %v117 = vpop.f32.mrb[0].mxu0
  %118 = vdwg.mxu0
  %v119 = vmax.f32 %v111, 0.0
  %v120 = vmax.f32 %v116, 0.0
  %v121 = vld [vmem:[%s2 + $0x10] sm:$0xff]
  %v122 = vld [vmem:[%s2 + $0x18] sm:$0xff]
  %v123 = vld [vmem:[%s3 + $0x10] sm:$0xff]
  %v124 = vld [vmem:[%s3 + $0x18] sm:$0xff]
  %126 = vset.pattern.permute.xlu0 0
  %127 = vperm.xlu0 %126, %v123
  %v128 = vpop.permute.xlu0 %127
  %131 = vset.pattern.permute.xlu0 0
  %132 = vperm.xlu0 %131, %v124
  %v133 = vpop.permute.xlu0 %132
  %vm135 = vcmask 130048
  %v137 = vsel %vm135, %v121, 0
  %v140 = vsel %vm135, %v122, 0
  %142 = vmatprep.subr.mxu0 0.0
  %143 = vmatpush1.msra.mxu0 %v119
  %144 = vmatprep.subr.mxu0 0.0
  %145 = vmatpush1.msra.mxu0 %v120
  %146 = vmatprep.subr.mxu0 0.0
  %147 = vmatpush1.msra.mxu0 0.0
  %148 = vmatprep.subr.mxu0 0.0
  %149 = vmatpush1.msra.mxu0 0.0
  %150 = vmatprep.subr.mxu0 0.0
  %151 = vmatpush1.msra.mxu0 0.0
  %152 = vmatprep.subr.mxu0 0.0
  %153 = vmatpush1.msra.mxu0 0.0
  %154 = vmatprep.subr.mxu0 0.0
  %155 = vmatpush1.msra.mxu0 0.0
  %156 = vmatprep.subr.mxu0 0.0
  %157 = vmatpush1.msra.mxu0 0.0
  %158 = vmatprep.subr.mxu0 0.0
  %159 = vmatpush1.msra.mxu0 0.0
  %160 = vmatprep.subr.mxu0 0.0
  %161 = vmatpush1.msra.mxu0 0.0
  %162 = vmatprep.subr.mxu0 0.0
  %163 = vmatpush1.msra.mxu0 0.0
  %164 = vmatprep.subr.mxu0 0.0
  %165 = vmatpush1.msra.mxu0 0.0
  %166 = vmatprep.subr.mxu0 0.0
  %167 = vmatpush1.msra.mxu0 0.0
  %168 = vmatprep.subr.mxu0 0.0
  %169 = vmatpush1.msra.mxu0 0.0
  %170 = vmatprep.subr.mxu0 0.0
  %171 = vmatpush1.msra.mxu0 0.0
  %172 = vmatprep.subr.mxu0 0.0
  %173 = vmatpush1.msra.mxu0 0.0
  %174 = vmatprep.subr.mxu0 0.0
  %175 = vmatpush1.msra.mxu0 0.0
  %176 = vmatprep.subr.mxu0 0.0
  %177 = vmatpush1.msra.mxu0 0.0
  %178 = vmatprep.subr.mxu0 0.0
  %179 = vmatpush1.msra.mxu0 0.0
  %180 = vmatprep.subr.mxu0 0.0
  %181 = vmatpush1.msra.mxu0 0.0
  %182 = vmatprep.subr.mxu0 0.0
  %183 = vmatpush1.msra.mxu0 0.0
  %184 = vmatprep.subr.mxu0 0.0
  %185 = vmatpush1.msra.mxu0 0.0
  %186 = vmatprep.subr.mxu0 0.0
  %187 = vmatpush1.msra.mxu0 0.0
  %188 = vmatprep.subr.mxu0 0.0
  %189 = vmatpush1.msra.mxu0 0.0
  %190 = vmatprep.subr.mxu0 0.0
  %191 = vmatpush1.msra.mxu0 0.0
  %192 = vmatprep.subr.mxu0 0.0
  %193 = vmatpush1.msra.mxu0 0.0
  %194 = vmatprep.subr.mxu0 0.0
  %195 = vmatpush1.msra.mxu0 0.0
  %196 = vmatprep.subr.mxu0 0.0
  %197 = vmatpush1.msra.mxu0 0.0
  %198 = vmatprep.subr.mxu0 0.0
  %199 = vmatpush1.msra.mxu0 0.0
  %200 = vmatprep.subr.mxu0 0.0
  %201 = vmatpush1.msra.mxu0 0.0
  %202 = vmatprep.subr.mxu0 0.0
  %203 = vmatpush1.msra.mxu0 0.0
  %204 = vmatprep.subr.mxu0 0.0
  %205 = vmatpush1.msra.mxu0 0.0
  %206 = vmatprep.mubr.f32.mxu0 0.0
  %207 = vmatmul.mubr.f32.gmra.mrb[0].mxu0 %v137
  %v208 = vpop.f32.mrb[0].mxu0
  %v209 = vadd.f32 %v128, %v208
  %v210 = vpop.f32.mrb[0].mxu0
  %211 = vmatprep.mubr.f32.mxu0 0.0
  %212 = vmatmul.mubr.f32.gmra.mrb[0].mxu0 %v140
  %v213 = vpop.f32.mrb[0].mxu0
  %v214 = vadd.f32 %v133, %v213
  %v215 = vpop.f32.mrb[0].mxu0
  %216 = vdwg.mxu0
  %v217 = vmax.f32 %v209, 0.0
  %v218 = vmax.f32 %v214, 0.0
  %v219 = vld [vmem:[%s2 + $0x20] sm:$0xff]
  %v220 = vld [vmem:[%s2 + $0x28] sm:$0xff]
  %v221 = vld [vmem:[%s3 + $0x20] sm:$0xff]
  %v222 = vld [vmem:[%s3 + $0x28] sm:$0xff]
  %224 = vset.pattern.permute.xlu0 0
  %225 = vperm.xlu0 %224, %v221
  %v226 = vpop.permute.xlu0 %225
  %229 = vset.pattern.permute.xlu0 0
  %230 = vperm.xlu0 %229, %v222
  %v231 = vpop.permute.xlu0 %230
  %v234 = vsel %vm135, %v219, 0
  %v237 = vsel %vm135, %v220, 0
  %239 = vmatprep.subr.mxu0 0.0
  %240 = vmatpush1.msra.mxu0 %v217
  %241 = vmatprep.subr.mxu0 0.0
  %242 = vmatpush1.msra.mxu0 %v218
  %243 = vmatprep.subr.mxu0 0.0
  %244 = vmatpush1.msra.mxu0 0.0
  %245 = vmatprep.subr.mxu0 0.0
  %246 = vmatpush1.msra.mxu0 0.0
  %247 = vmatprep.subr.mxu0 0.0
  %248 = vmatpush1.msra.mxu0 0.0
  %249 = vmatprep.subr.mxu0 0.0
  %250 = vmatpush1.msra.mxu0 0.0
  %251 = vmatprep.subr.mxu0 0.0
  %252 = vmatpush1.msra.mxu0 0.0
  %253 = vmatprep.subr.mxu0 0.0
  %254 = vmatpush1.msra.mxu0 0.0
  %255 = vmatprep.subr.mxu0 0.0
  %256 = vmatpush1.msra.mxu0 0.0
  %257 = vmatprep.subr.mxu0 0.0
  %258 = vmatpush1.msra.mxu0 0.0
  %259 = vmatprep.subr.mxu0 0.0
  %260 = vmatpush1.msra.mxu0 0.0
  %261 = vmatprep.subr.mxu0 0.0
  %262 = vmatpush1.msra.mxu0 0.0
  %263 = vmatprep.subr.mxu0 0.0
  %264 = vmatpush1.msra.mxu0 0.0
  %265 = vmatprep.subr.mxu0 0.0
  %266 = vmatpush1.msra.mxu0 0.0
  %267 = vmatprep.subr.mxu0 0.0
  %268 = vmatpush1.msra.mxu0 0.0
  %269 = vmatprep.subr.mxu0 0.0
  %270 = vmatpush1.msra.mxu0 0.0
  %271 = vmatprep.subr.mxu0 0.0
  %272 = vmatpush1.msra.mxu0 0.0
  %273 = vmatprep.subr.mxu0 0.0
  %274 = vmatpush1.msra.mxu0 0.0
  %275 = vmatprep.subr.mxu0 0.0
  %276 = vmatpush1.msra.mxu0 0.0
  %277 = vmatprep.subr.mxu0 0.0
  %278 = vmatpush1.msra.mxu0 0.0
  %279 = vmatprep.subr.mxu0 0.0
  %280 = vmatpush1.msra.mxu0 0.0
  %281 = vmatprep.subr.mxu0 0.0
  %282 = vmatpush1.msra.mxu0 0.0
  %283 = vmatprep.subr.mxu0 0.0
  %284 = vmatpush1.msra.mxu0 0.0
  %285 = vmatprep.subr.mxu0 0.0
  %286 = vmatpush1.msra.mxu0 0.0
  %287 = vmatprep.subr.mxu0 0.0
  %288 = vmatpush1.msra.mxu0 0.0
  %289 = vmatprep.subr.mxu0 0.0
  %290 = vmatpush1.msra.mxu0 0.0
  %291 = vmatprep.subr.mxu0 0.0
  %292 = vmatpush1.msra.mxu0 0.0
  %293 = vmatprep.subr.mxu0 0.0
  %294 = vmatpush1.msra.mxu0 0.0
  %295 = vmatprep.subr.mxu0 0.0
  %296 = vmatpush1.msra.mxu0 0.0
  %297 = vmatprep.subr.mxu0 0.0
  %298 = vmatpush1.msra.mxu0 0.0
  %299 = vmatprep.subr.mxu0 0.0
  %300 = vmatpush1.msra.mxu0 0.0
  %301 = vmatprep.subr.mxu0 0.0
  %302 = vmatpush1.msra.mxu0 0.0
  %303 = vmatprep.mubr.f32.mxu0 0.0
  %304 = vmatmul.mubr.f32.gmra.mrb[0].mxu0 %v234
  %v305 = vpop.f32.mrb[0].mxu0
  %v306 = vadd.f32 %v226, %v305
  %v307 = vpop.f32.mrb[0].mxu0
  %308 = vmatprep.mubr.f32.mxu0 0.0
  %309 = vmatmul.mubr.f32.gmra.mrb[0].mxu0 %v237
  %v310 = vpop.f32.mrb[0].mxu0
  %v311 = vadd.f32 %v231, %v310
  %v312 = vpop.f32.mrb[0].mxu0
  %313 = vdwg.mxu0
  %v314 = vtanh.pop %v306
  %v315 = vmul.f32 %v314, 2.0
  %vm316 = vcmp.gt.f32.partialorder %v311, 20.0
  %v317 = vmin.f32 %v311, 20.0
  %v318 = vmul.f32 %v317, 1.442695
  %v319 = vpow.pop %v318
  %v320 = vadd.f32 %v319, 1.0
  %v321 = vlog2.pop %v320
  %v322 = vmul.f32 %v321, 0.6931472
  %v323 = vmul.f32 -0.5, %v319
  %v324 = vadd.f32 %v323, 1.0
  %v325 = vmul.f32 %v324, %v319
  %v326 = vand.u32 2147483647, %v319
  %vm327 = vcmp.lt.f32.partialorder %v326, 0.0004427343
  %v328 = vsel %vm327, %v325, %v322
  %v329 = vsel %vm316, %v311, %v328
  %v330 = vld [vmem:[%s1] sm:$0xf]
  %v331 = vmul.f32 %v329, %v330
  %v332 = vadd.f32 %v315, %v331
  %v333 = vlog2.pop %v329
  %v334 = vmul.f32 %v333, 0.6931472
  %v335 = vadd.f32 %v334, 1.4189385
  %v336 = vld [vmem:[#allocation2] sm:$0x1]
  %s337 = vtos %v336
  %s338 = ssub.f32 0.0, %s337
  %v339 = vstv %s338
  %v340 = vmax.f32 %v339, %v332
  %v341 = vstv %s337
  %v342 = vmin.f32 %v341, %v340
  %v343 = vrcp.pop %v329
  %v344 = vsub.f32 %v342, %v315
  %v345 = vmul.f32 %v344, %v343
  %v346 = vmul.f32 %v345, -0.5
  %v347 = vmul.f32 %v346, %v345
  %v348 = vsub.f32 %v347, %v334
  %v349 = vsub.f32 %v348, 0.9189385
  %350 = vst [vmem:[%s5] sm:$0xf] %v342
  %351 = vst [vmem:[%s5 + $0x4] sm:$0xf] %v349
  %352 = vst [vmem:[%s5 + $0x8] sm:$0xf] %v335
  %353 = vst [vmem:[%s5 + $0xc] sm:$0xf] 0.0
  // Predicated region
  $region22: #{_forward.1} parent=0 // pred_check
    _
  $region23: #{_forward.1} parent=0 // pred_check_branch
    %355 = sbr.rel (0) target = $region25
  $region24: #{_forward.1} parent=0 // pred_region
    _
  $region25: #{_forward.1} parent=0 // pred_fallthru
    _
  // Predicated region
  $region26: #{_forward.1} parent=0 // pred_check
    _
  $region27: #{_forward.1} parent=0 // pred_check_branch
    %357 = sbr.rel (0) target = $region29
  $region28: #{_forward.1} parent=0 // pred_region
    _
  $region29: #{_forward.1} parent=0 // pred_fallthru
    _

</llo_original>
